<compile_context>
chip_gen: v5e
topology: v5e:2x2
jax: 0.10.0
libtpu: 0.0.40
codegen_flags: <defaults>
</compile_context>

<pallas_src>
import jax
import jax.numpy as jnp
from jax.experimental import pallas as pl
from jax.experimental.pallas import tpu as pltpu

EPS = 1e-5


def _round_up(x, m):
    return ((x + m - 1) // m) * m


def _vmem_capacity_bytes():
    """Per-TensorCore VMEM capacity; conservative 64 MiB (v7x) fallback."""
    try:
        info = pltpu.get_tpu_info()
        cap = getattr(info, "vmem_capacity_bytes", None)
        if cap:
            return int(cap)
    except Exception:
        pass
    return 64 * 1024 * 1024


def _make_prenorm_kernel(d_real, d_pad):
    """Fused LayerNorm + Linear kernel for a (possibly lane-padded) D."""
    inv_d = 1.0 / float(d_real)
    need_mask = d_pad != d_real

    def kernel(x_ref, gamma_ref, beta_ref, w_ref, b_ref, o_ref, normed_ref):
        # Grid: (row tiles i, output-column tiles j).  The LayerNorm of this
        # row tile is computed once (j == 0) into a VMEM scratch in the matmul
        # operand dtype and reused for every output-column block.
        j = pl.program_id(1)

        @pl.when(j == 0)
        def _():
            x = x_ref[...].astype(jnp.float32)
            gamma = gamma_ref[...].astype(jnp.float32)
            beta = beta_ref[...].astype(jnp.float32)
            # Padded lanes of x are zero, so the raw sum already equals the
            # sum over the real lanes; divide by the *real* D.
            mean = jnp.sum(x, axis=-1, keepdims=True) * inv_d
            centered = x - mean
            if need_mask:
                lane = jax.lax.broadcasted_iota(jnp.int32, (1, d_pad), 1)
                centered = jnp.where(lane < d_real, centered, 0.0)
            var = jnp.sum(centered * centered, axis=-1, keepdims=True) * inv_d
            inv_std = jax.lax.rsqrt(var + EPS)
            # Fuse scale/shift and cast immediately so the f32 temporaries die
            # before the matmul (padded lanes -> beta = 0 -> zero rows of w).
            normed_ref[...] = (centered * (inv_std * gamma) + beta).astype(
                normed_ref.dtype)

        # fn: Linear(dim, dim) with f32 accumulation on the MXU.
        y = jnp.dot(normed_ref[...], w_ref[...],
                    preferred_element_type=jnp.float32)
        y = y + b_ref[...].astype(jnp.float32)
        o_ref[...] = y.astype(o_ref.dtype)

    return kernel


def prenorm_linear(x, gamma, beta, w, b, *, tm_max=1024):
    """PreNorm(LayerNorm(D), Linear(D, D)).  x: (B, N, D) -> (B, N, D)."""
    B, N, D = x.shape
    M = B * N
    xb = jnp.dtype(x.dtype).itemsize
    wb = jnp.dtype(w.dtype).itemsize

    # Lane-dense feature dim (pad only when D is not already 128-aligned).
    D_pad = _round_up(D, 128)

    # --- generation-aware VMEM budget ---
    vmem_cap = _vmem_capacity_bytes()
    vmem_limit = (vmem_cap * 3) // 4          # ~48 MiB on v7x, ~96 MiB on v5e/v6e
    budget = vmem_limit - (4 << 20)           # headroom for Mosaic internals

    # Per-row VMEM bytes of row-dependent buffers: double-buffered x tile,
    # LayerNorm scratch (matmul operand dtype), ~3 live f32 body temporaries,
    # plus double-buffered output tile and the f32 matmul result.
    def per_row_bytes(tn):
        return D_pad * (2 * xb + wb + 3 * 4) + tn * (2 * xb + 4)

    # 1) Prefer a fully VMEM-resident, single-buffered weight.
    TN, grid_n = D_pad, 1
    resident_fixed = D_pad * D_pad * wb + 4 * D_pad * 4
    tm_cap = (budget - resident_fixed) // per_row_bytes(D_pad)
    if tm_cap < 256:
        # 2) Weight too large to pin (e.g. v7x 64 MiB VMEM at large D): stream
        #    it column-by-column (double-buffered), reusing the LayerNorm
        #    scratch across output-column blocks.
        for cand in (1024, 512, 256, 128):
            if cand >= D_pad or D_pad % cand:
                continue
            fixed = 2 * D_pad * cand * wb + 4 * D_pad * 4
            cap = (budget - fixed) // per_row_bytes(cand)
            if cap >= 256 or cand == 128:
                TN, grid_n, tm_cap = cand, D_pad // cand, cap
                break

    # Row tile: no padding of M -- the ragged last tile is handled by Pallas
    # (OOB reads are row-independent garbage, OOB stores are masked).
    TM = min(tm_max, max(int(tm_cap), 8), _round_up(M, 8))
    # v7x megacore: keep >= 2 grid steps per TensorCore along the row axis.
    TM = min(TM, _round_up(pl.cdiv(M, 4), 8))
    # MXU-aligned row tile (256-native on v6e/v7x, 128 on v5e); 8 is the floor.
    if TM >= 256:
        TM = (TM // 256) * 256
    elif TM >= 128:
        TM = 128
    else:
        TM = max((TM // 8) * 8, 8)
    grid_m = pl.cdiv(M, TM)

    # Pad only the feature dim, and only when needed.
    x2d = x.reshape(M, D)
    gamma2d = gamma.reshape(1, D)
    beta2d = beta.reshape(1, D)
    b2d = b.reshape(1, D)
    w2d = w
    if D_pad != D:
        dp = D_pad - D
        x2d = jnp.pad(x2d, ((0, 0), (0, dp)))
        gamma2d = jnp.pad(gamma2d, ((0, 0), (0, dp)))
        beta2d = jnp.pad(beta2d, ((0, 0), (0, dp)))
        b2d = jnp.pad(b2d, ((0, 0), (0, dp)))
        w2d = jnp.pad(w2d, ((0, dp), (0, dp)))

    kernel = _make_prenorm_kernel(D, D_pad)

    # Weight/bias: single-buffered when fully resident (block index never
    # changes), default double-buffering when streamed over columns.
    if grid_n == 1:
        w_spec = pl.BlockSpec((D_pad, TN), lambda i, j: (0, j),
                              pipeline_mode=pl.Buffered(1))
        b_spec = pl.BlockSpec((1, TN), lambda i, j: (0, j),
                              pipeline_mode=pl.Buffered(1))
    else:
        w_spec = pl.BlockSpec((D_pad, TN), lambda i, j: (0, j))
        b_spec = pl.BlockSpec((1, TN), lambda i, j: (0, j))

    cost = pl.CostEstimate(
        flops=2 * M * D_pad * D_pad + 8 * M * D_pad,
        transcendentals=M,
        bytes_accessed=(2 * M * D_pad + 3 * D_pad) * xb + D_pad * D_pad * wb,
    )

    out = pl.pallas_call(
        kernel,
        out_shape=jax.ShapeDtypeStruct((M, D_pad), x.dtype),
        grid_spec=pltpu.PrefetchScalarGridSpec(
            num_scalar_prefetch=0,
            grid=(grid_m, grid_n),
            in_specs=[
                pl.BlockSpec((TM, D_pad), lambda i, j: (i, 0)),        # x tile
                pl.BlockSpec((1, D_pad), lambda i, j: (0, 0),
                             pipeline_mode=pl.Buffered(1)),            # gamma
                pl.BlockSpec((1, D_pad), lambda i, j: (0, 0),
                             pipeline_mode=pl.Buffered(1)),            # beta
                w_spec,                                                # weight
                b_spec,                                                # bias
            ],
            out_specs=pl.BlockSpec((TM, TN), lambda i, j: (i, j)),
            scratch_shapes=[pltpu.VMEM((TM, D_pad), w.dtype)],         # normed
        ),
        compiler_params=pltpu.CompilerParams(
            dimension_semantics=("parallel", "arbitrary"),
            vmem_limit_bytes=int(vmem_limit),
        ),
        cost_estimate=cost,
    )(x2d, gamma2d, beta2d, w2d, b2d)

    if D_pad != D:
        out = out[:, :D]
    return out.reshape(B, N, D)


def _reference(x, gamma, beta, w, b):
    mean = jnp.mean(x, axis=-1, keepdims=True)
    var = jnp.mean((x - mean) ** 2, axis=-1, keepdims=True)
    normed = (x - mean) / jnp.sqrt(var + EPS)
    normed = normed * gamma + beta
    return jnp.einsum("bnd,de->bne", normed, w) + b


if __name__ == "__main__":
    B, N, D = 2, 8, 32
    key = jax.random.PRNGKey(0)
    kx, kw = jax.random.split(key)

    x = jax.random.normal(kx, (B, N, D), dtype=jnp.float32)

    # nn.LayerNorm default affine params (gamma=1, beta=0); Linear weights from PRNG.
    # TODO(synk): `fn` is generic in the PyTorch module; instantiated here as Linear(D, D).
    gamma = jnp.ones((D,), dtype=jnp.float32)
    beta = jnp.zeros((D,), dtype=jnp.float32)
    w = jax.random.normal(kw, (D, D), dtype=jnp.float32) * 0.02
    b = jnp.zeros((D,), dtype=jnp.float32)

    run = jax.jit(prenorm_linear)
    out = jax.block_until_ready(run(x, gamma, beta, w, b))

    ref = _reference(x, gamma, beta, w, b)
    assert out.shape == (B, N, D)
    assert jnp.allclose(out, ref, atol=2e-3, rtol=2e-3), "mismatch vs reference"

    print("KERNEL_OK")
</pallas_src>

<mosaic_0001>
module attributes {stable_mosaic.version = 11 : i64} {
  func.func @kernel(%arg0: i32, %arg1: i32, %arg2: memref<8x128xf32, #tpu.memory_space<vmem>>, %arg3: memref<1x128xf32, #tpu.memory_space<vmem>>, %arg4: memref<1x128xf32, #tpu.memory_space<vmem>>, %arg5: memref<128x128xf32, #tpu.memory_space<vmem>>, %arg6: memref<1x128xf32, #tpu.memory_space<vmem>>, %arg7: memref<8x128xf32, #tpu.memory_space<vmem>>, %arg8: memref<8x128xf32, #tpu.memory_space<vmem>>) attributes {dimension_semantics = [#tpu.dimension_semantics<parallel>, #tpu.dimension_semantics<arbitrary>], iteration_bounds = array<i64: 2, 1>, scalar_prefetch = 0 : i64, scratch_operands = 1 : i64, tpu.core_type = #tpu.core_type<tc>, window_params = [{transform_indices = @transform_0, window_bounds = array<i64: 8, 128>}, {pipeline_mode = #tpu.pipeline_mode<synchronous>, transform_indices = @transform_1, window_bounds = array<i64: 1, 128>}, {pipeline_mode = #tpu.pipeline_mode<synchronous>, transform_indices = @transform_2, window_bounds = array<i64: 1, 128>}, {pipeline_mode = #tpu.pipeline_mode<synchronous>, transform_indices = @transform_3, window_bounds = array<i64: 128, 128>}, {pipeline_mode = #tpu.pipeline_mode<synchronous>, transform_indices = @transform_4, window_bounds = array<i64: 1, 128>}, {transform_indices = @transform_5, window_bounds = array<i64: 8, 128>}]} {
    %c0_i32 = arith.constant 0 : i32
    %0 = arith.cmpi eq, %arg1, %c0_i32 : i32
    %1 = arith.extui %0 : i1 to i32
    %c0_i32_0 = arith.constant 0 : i32
    %2 = arith.cmpi ne, %1, %c0_i32_0 : i32
    scf.if %2 {
      %c0_8 = arith.constant 0 : index
      %c0_9 = arith.constant 0 : index
      %10 = vector.load %arg2[%c0_8, %c0_9] : memref<8x128xf32, #tpu.memory_space<vmem>>, vector<8x128xf32>
      %c0_10 = arith.constant 0 : index
      %c0_11 = arith.constant 0 : index
      %11 = vector.load %arg3[%c0_10, %c0_11] : memref<1x128xf32, #tpu.memory_space<vmem>>, vector<1x128xf32>
      %c0_12 = arith.constant 0 : index
      %c0_13 = arith.constant 0 : index
      %12 = vector.load %arg4[%c0_12, %c0_13] : memref<1x128xf32, #tpu.memory_space<vmem>>, vector<1x128xf32>
      %cst_14 = arith.constant dense<0.000000e+00> : vector<8xf32>
      %13 = vector.multi_reduction <add>, %10, %cst_14 [1] : vector<8x128xf32> to vector<8xf32>
      %14 = vector.shape_cast %13 : vector<8xf32> to vector<8x1xf32>
      %cst_15 = arith.constant 3.125000e-02 : f32
      %15 = vector.broadcast %cst_15 : f32 to vector<8x1xf32>
      %16 = arith.mulf %14, %15 : vector<8x1xf32>
      %17 = vector.broadcast %16 : vector<8x1xf32> to vector<8x128xf32>
      %18 = arith.subf %10, %17 : vector<8x128xf32>
      %19 = tpu.iota {dimensions = array<i32: 1>} : vector<1x128xi32>
      %c32_i32 = arith.constant 32 : i32
      %20 = vector.broadcast %c32_i32 : i32 to vector<1x128xi32>
      %21 = arith.cmpi slt, %19, %20 : vector<1x128xi32>
      %cst_16 = arith.constant 0.000000e+00 : f32
      %22 = vector.shape_cast %21 : vector<1x128xi1> to vector<1x128xi1>
      %23 = vector.broadcast %22 : vector<1x128xi1> to vector<8x128xi1>
      %24 = vector.broadcast %cst_16 : f32 to vector<8x128xf32>
      %25 = arith.select %23, %18, %24 : vector<8x128xi1>, vector<8x128xf32>
      %26 = arith.mulf %25, %25 : vector<8x128xf32>
      %cst_17 = arith.constant dense<0.000000e+00> : vector<8xf32>
      %27 = vector.multi_reduction <add>, %26, %cst_17 [1] : vector<8x128xf32> to vector<8xf32>
      %28 = vector.shape_cast %27 : vector<8xf32> to vector<8x1xf32>
      %cst_18 = arith.constant 3.125000e-02 : f32
      %29 = vector.broadcast %cst_18 : f32 to vector<8x1xf32>
      %30 = arith.mulf %28, %29 : vector<8x1xf32>
      %cst_19 = arith.constant 9.99999974E-6 : f32
      %31 = vector.broadcast %cst_19 : f32 to vector<8x1xf32>
      %32 = arith.addf %30, %31 : vector<8x1xf32>
      %33 = math.rsqrt %32 : vector<8x1xf32>
      %34 = vector.broadcast %33 : vector<8x1xf32> to vector<8x128xf32>
      %35 = vector.broadcast %11 : vector<1x128xf32> to vector<8x128xf32>
      %36 = arith.mulf %34, %35 : vector<8x128xf32>
      %37 = arith.mulf %25, %36 : vector<8x128xf32>
      %38 = vector.broadcast %12 : vector<1x128xf32> to vector<8x128xf32>
      %39 = arith.addf %37, %38 : vector<8x128xf32>
      %c0_20 = arith.constant 0 : index
      %c0_21 = arith.constant 0 : index
      %40 = vector.load %arg8[%c0_20, %c0_21] : memref<8x128xf32, #tpu.memory_space<vmem>>, vector<8x128xf32>
      tpu.vector_store %arg8[%c0_20, %c0_21], %39 {strides = array<i32>} : memref<8x128xf32, #tpu.memory_space<vmem>>, vector<8x128xf32>,
    } else {
    }
    %c0 = arith.constant 0 : index
    %c0_1 = arith.constant 0 : index
    %3 = vector.load %arg8[%c0, %c0_1] : memref<8x128xf32, #tpu.memory_space<vmem>>, vector<8x128xf32>
    %c0_2 = arith.constant 0 : index
    %c0_3 = arith.constant 0 : index
    %4 = vector.load %arg5[%c0_2, %c0_3] : memref<128x128xf32, #tpu.memory_space<vmem>>, vector<128x128xf32>
    %cst = arith.constant dense<0.000000e+00> : vector<8x128xf32>
    %5 = tpu.matmul %3, %4, %cst {dimension_numbers = #tpu.dot_dimension_numbers<[1], [0], [0], [1], [0, 0, 1, 1], [], []>} : vector<8x128xf32>, vector<128x128xf32>, vector<8x128xf32> -> vector<8x128xf32>
    %c0_4 = arith.constant 0 : index
    %c0_5 = arith.constant 0 : index
    %6 = vector.load %arg6[%c0_4, %c0_5] : memref<1x128xf32, #tpu.memory_space<vmem>>, vector<1x128xf32>
    %7 = vector.broadcast %6 : vector<1x128xf32> to vector<8x128xf32>
    %8 = arith.addf %5, %7 : vector<8x128xf32>
    %c0_6 = arith.constant 0 : index
    %c0_7 = arith.constant 0 : index
    %9 = vector.load %arg7[%c0_6, %c0_7] : memref<8x128xf32, #tpu.memory_space<vmem>>, vector<8x128xf32>
    tpu.vector_store %arg7[%c0_6, %c0_7], %8 {strides = array<i32>} : memref<8x128xf32, #tpu.memory_space<vmem>>, vector<8x128xf32>,
    return
  }
  func.func @transform_0(%arg0: i32, %arg1: i32) -> (i32, i32) {
    %c0_i32 = arith.constant 0 : i32
    %c0_i32_0 = arith.constant 0 : i32
    return %arg0, %c0_i32 : i32, i32
  }
  func.func @transform_1(%arg0: i32, %arg1: i32) -> (i32, i32) {
    %c0_i32 = arith.constant 0 : i32
    %c0_i32_0 = arith.constant 0 : i32
    %c0_i32_1 = arith.constant 0 : i32
    return %c0_i32, %c0_i32_0 : i32, i32
  }
  func.func @transform_2(%arg0: i32, %arg1: i32) -> (i32, i32) {
    %c0_i32 = arith.constant 0 : i32
    %c0_i32_0 = arith.constant 0 : i32
    %c0_i32_1 = arith.constant 0 : i32
    return %c0_i32, %c0_i32_0 : i32, i32
  }
  func.func @transform_3(%arg0: i32, %arg1: i32) -> (i32, i32) {
    %c0_i32 = arith.constant 0 : i32
    %c0_i32_0 = arith.constant 0 : i32
    return %c0_i32, %arg1 : i32, i32
  }
  func.func @transform_4(%arg0: i32, %arg1: i32) -> (i32, i32) {
    %c0_i32 = arith.constant 0 : i32
    %c0_i32_0 = arith.constant 0 : i32
    return %c0_i32, %arg1 : i32, i32
  }
  func.func @transform_5(%arg0: i32, %arg1: i32) -> (i32, i32) {
    %c0_i32 = arith.constant 0 : i32
    return %arg0, %arg1 : i32, i32
  }
}

</mosaic_0001>

<llo_original>
// kernel: prenorm_linear.1
$region0: #{prenorm_linear.1}
  #allocation0 [shape = 'u32[]', space=smem, size = 0x4, offset = 0x4, fixed_abs, tag = 'smem constant byte address 0x4 - core index']
  #allocation1 [shape = 'u32[72,128]{1,0:T(1,128)}', space=vmem, size = 0x9000, scoped, tag = 'internal scratch']
  #allocation2 [shape = 'f32[8,128]{1,0:T(8,128)}', space=vmem, size = 0x1000, scoped, tag = 'scratch operand']
  %s0 = inlined_call_operand.vmem [shape: f32[16,128], index: 0, kind: input, shape index: {}]
  %s1 = inlined_call_operand.vmem [shape: f32[1,128], index: 1, kind: input, shape index: {}]
  %s2 = inlined_call_operand.vmem [shape: f32[1,128], index: 2, kind: input, shape index: {}]
  %s3 = inlined_call_operand.vmem [shape: f32[128,128], index: 3, kind: input, shape index: {}]
  %s4 = inlined_call_operand.vmem [shape: f32[1,128], index: 4, kind: input, shape index: {}]
  %s5 = inlined_call_operand.vmem [shape: f32[16,128], index: 5, kind: output, shape index: {}]
  %s6 = sld [smem:[#allocation0]]
  $region57: #{prenorm_linear.1} parent=0
    _
  %s8 = ssub.s32 1, %s6
  %s9 = scalar_select 0, %s8, %s6
  loop: start=0, step=1, limit=4
  $region2: #{prenorm_linear.1} parent=0 // loop_pre_header
    _
  $region3: #{prenorm_linear.1} parent=0 // loop_header
    %s11 = sphi 0, %s15
    %p12 = scmp.ge.s32.totalorder %s11, 4
    %s18 = sphi 0, %s30
    %s19 = sphi 0, %s26
    %s20 = sphi 0, %s18
    %s21 = sphi 0, %s19
    %s22 = sphi 0, %s20
    %s23 = sphi 0, %s21
    %s33 = sphi 0, %s35
    %s36 = sphi 0, %s33
    %s37 = sphi 0, %s36
    %s53 = sphi 0, %s37
    %s57 = sphi 0, %s57
    %s59 = sphi 0, %s57
    %s60 = sphi 0, %s59
    %s74 = sphi 0, %s60
    %s78 = sphi 0, %s78
    %s80 = sphi 0, %s78
    %s81 = sphi 0, %s80
    %s95 = sphi 0, %s81
    %s101 = sphi 0, %s103
    %s104 = sphi 0, %s101
    %s105 = sphi 0, %s104
    %s121 = sphi 0, %s105
    %s127 = sphi 0, %s129
    %s130 = sphi 0, %s127
    %s131 = sphi 0, %s130
    %s147 = sphi 0, %s131
    %s155 = sphi 0, %s157
    %s158 = sphi 0, %s155
    %s159 = sphi 0, %s158
    %s175 = sphi 0, %s159
  $region4: #{prenorm_linear.1} parent=0 // loop_header_branch
    %14 = sbr.rel (%p12) target = $region8
  $region5: #{prenorm_linear.1} parent=0 // loop_body
    %s16 = ssub.s32 %s11, 1
    %s17 = ssub.s32 %s11, 2
    %s24 = sadd.s32 1, %s19
    %p25 = scmp.ge.s32.totalorder %s24, 1
    %s26 = scalar_select %p25, 0, %s24
    %s27 = sadd.s32 1, %s18
    %s28 = scalar_select %p25, %s27, %s18
    %p29 = scmp.ge.s32.totalorder %s28, 2
    %s30 = scalar_select %p29, 0, %s28
    %s31 = ssub.s32 %s18, %s30
    %p32 = scmp.eq.s32.totalorder %s31, 0
    %s34 = sadd.s32 %s33, 1
    %s35 = scalar_select %p32, %s33, %s34
    %p38 = pneg %p32
    %p39 = scmp.eq.s32.totalorder %s11, 1
    %p40 = por %p38, %p39
    %p41 = scmp.ne.s32.totalorder %s33, %s36
    %p42 = scmp.eq.s32.totalorder %s11, 0
    %p43 = por %p41, %p42
    %p44 = scmp.ne.s32.totalorder %s33, %s36
    %p45 = scmp.eq.s32.totalorder %s16, 1
    %p46 = por %p44, %p45
    %p47 = scmp.ne.s32.totalorder %s36, %s37
    %p48 = scmp.eq.s32.totalorder %s16, 0
    %p49 = por %p47, %p48
    %p50 = scmp.ne.s32.totalorder %s36, %s37
    %p51 = scmp.eq.s32.totalorder %s17, 1
    %p52 = por %p50, %p51
    %p54 = scmp.ne.s32.totalorder %s37, %s53
    %p55 = scmp.eq.s32.totalorder %s17, 0
    %p56 = por %p54, %p55
    %s58 = sadd.s32 %s57, 1
    %p61 = scmp.eq.s32.totalorder %s11, 1
    %p62 = scmp.ne.s32.totalorder %s57, %s59
    %p63 = scmp.eq.s32.totalorder %s11, 0
    %p64 = por %p62, %p63
    %p65 = scmp.ne.s32.totalorder %s57, %s59
    %p66 = scmp.eq.s32.totalorder %s16, 1
    %p67 = por %p65, %p66
    %p68 = scmp.ne.s32.totalorder %s59, %s60
    %p69 = scmp.eq.s32.totalorder %s16, 0
    %p70 = por %p68, %p69
    %p71 = scmp.ne.s32.totalorder %s59, %s60
    %p72 = scmp.eq.s32.totalorder %s17, 1
    %p73 = por %p71, %p72
    %p75 = scmp.ne.s32.totalorder %s60, %s74
    %p76 = scmp.eq.s32.totalorder %s17, 0
    %p77 = por %p75, %p76
    %s79 = sadd.s32 %s78, 1
    %p82 = scmp.eq.s32.totalorder %s11, 1
    %p83 = scmp.ne.s32.totalorder %s78, %s80
    %p84 = scmp.eq.s32.totalorder %s11, 0
    %p85 = por %p83, %p84
    %p86 = scmp.ne.s32.totalorder %s78, %s80
    %p87 = scmp.eq.s32.totalorder %s16, 1
    %p88 = por %p86, %p87
    %p89 = scmp.ne.s32.totalorder %s80, %s81
    %p90 = scmp.eq.s32.totalorder %s16, 0
    %p91 = por %p89, %p90
    %p92 = scmp.ne.s32.totalorder %s80, %s81
    %p93 = scmp.eq.s32.totalorder %s17, 1
    %p94 = por %p92, %p93
    %p96 = scmp.ne.s32.totalorder %s81, %s95
    %p97 = scmp.eq.s32.totalorder %s17, 0
    %p98 = por %p96, %p97
    %s99 = ssub.s32 %s19, %s26
    %p100 = scmp.eq.s32.totalorder %s99, 0
    %s102 = sadd.s32 %s101, 1
    %s103 = scalar_select %p100, %s101, %s102
    %p106 = pneg %p100
    %p107 = scmp.eq.s32.totalorder %s11, 1
    %p108 = por %p106, %p107
    %p109 = scmp.ne.s32.totalorder %s101, %s104
    %p110 = scmp.eq.s32.totalorder %s11, 0
    %p111 = por %p109, %p110
    %p112 = scmp.ne.s32.totalorder %s101, %s104
    %p113 = scmp.eq.s32.totalorder %s16, 1
    %p114 = por %p112, %p113
    %p115 = scmp.ne.s32.totalorder %s104, %s105
    %p116 = scmp.eq.s32.totalorder %s16, 0
    %p117 = por %p115, %p116
    %p118 = scmp.ne.s32.totalorder %s104, %s105
    %p119 = scmp.eq.s32.totalorder %s17, 1
    %p120 = por %p118, %p119
    %p122 = scmp.ne.s32.totalorder %s105, %s121
    %p123 = scmp.eq.s32.totalorder %s17, 0
    %p124 = por %p122, %p123
    %s125 = ssub.s32 %s19, %s26
    %p126 = scmp.eq.s32.totalorder %s125, 0
    %s128 = sadd.s32 %s127, 1
    %s129 = scalar_select %p126, %s127, %s128
    %p132 = pneg %p126
    %p133 = scmp.eq.s32.totalorder %s11, 1
    %p134 = por %p132, %p133
    %p135 = scmp.ne.s32.totalorder %s127, %s130
    %p136 = scmp.eq.s32.totalorder %s11, 0
    %p137 = por %p135, %p136
    %p138 = scmp.ne.s32.totalorder %s127, %s130
    %p139 = scmp.eq.s32.totalorder %s16, 1
    %p140 = por %p138, %p139
    %p141 = scmp.ne.s32.totalorder %s130, %s131
    %p142 = scmp.eq.s32.totalorder %s16, 0
    %p143 = por %p141, %p142
    %p144 = scmp.ne.s32.totalorder %s130, %s131
    %p145 = scmp.eq.s32.totalorder %s17, 1
    %p146 = por %p144, %p145
    %p148 = scmp.ne.s32.totalorder %s131, %s147
    %p149 = scmp.eq.s32.totalorder %s17, 0
    %p150 = por %p148, %p149
    %s151 = ssub.s32 %s18, %s30
    %s152 = ssub.s32 %s19, %s26
    %s153 = sor.u32 %s151, %s152
    %p154 = scmp.eq.s32.totalorder %s153, 0
    %s156 = sadd.s32 %s155, 1
    %s157 = scalar_select %p154, %s155, %s156
    %p160 = pneg %p154
    %p161 = scmp.eq.s32.totalorder %s11, 1
    %p162 = por %p160, %p161
    %p163 = scmp.ne.s32.totalorder %s155, %s158
    %p164 = scmp.eq.s32.totalorder %s11, 0
    %p165 = por %p163, %p164
    %p166 = scmp.ne.s32.totalorder %s155, %s158
    %p167 = scmp.eq.s32.totalorder %s16, 1
    %p168 = por %p166, %p167
    %p169 = scmp.ne.s32.totalorder %s158, %s159
    %p170 = scmp.eq.s32.totalorder %s16, 0
    %p171 = por %p169, %p170
    %p172 = scmp.ne.s32.totalorder %s158, %s159
    %p173 = scmp.eq.s32.totalorder %s17, 1
    %p174 = por %p172, %p173
    %p176 = scmp.ne.s32.totalorder %s159, %s175
    %p177 = scmp.eq.s32.totalorder %s17, 0
    %p178 = por %p176, %p177
    %p179 = scmp.le.s32.totalorder 1, %s11
    %p180 = scmp.lt.s32.totalorder %s11, 3
    %p181 = pnand %p179, %p180
    %p182 = pneg %p181
    // Predicated region
    $region9: #{prenorm_linear.1} parent=5 // pred_check
      _
    $region10: #{prenorm_linear.1} parent=5 // pred_check_branch
      %184 = sbr.rel (%p181) target = $region12
    $region11: #{prenorm_linear.1} parent=5 // pred_region
      %s185 = ssub.s32 %s11, 1
      // Predicated region
      $region13: #{prenorm_linear.1} parent=11 // pred_check
        %p186 = pneg %p70
      $region14: #{prenorm_linear.1} parent=11 // pred_check_branch
        %188 = sbr.rel (%p186) target = $region16
      $region15: #{prenorm_linear.1} parent=11 // pred_region
        _
      $region16: #{prenorm_linear.1} parent=11 // pred_fallthru
        _
      // Predicated region
      $region17: #{prenorm_linear.1} parent=11 // pred_check
        %p189 = pneg %p91
      $region18: #{prenorm_linear.1} parent=11 // pred_check_branch
        %191 = sbr.rel (%p189) target = $region20
      $region19: #{prenorm_linear.1} parent=11 // pred_region
        _
      $region20: #{prenorm_linear.1} parent=11 // pred_fallthru
        _
      // Predicated region
      $region21: #{prenorm_linear.1} parent=11 // pred_check
        %p192 = pneg %p117
      $region22: #{prenorm_linear.1} parent=11 // pred_check_branch
        %194 = sbr.rel (%p192) target = $region24
      $region23: #{prenorm_linear.1} parent=11 // pred_region
        %p195 = scmp.lt.s32.totalorder %s21, 0
        %s196 = scalar_select %p195, %s21, 0
        %s197 = smul.addr %s196, 8
        %s198 = scalar_lea.vmem %s3, %s197
      $region24: #{prenorm_linear.1} parent=11 // pred_fallthru
        _
      // Predicated region
      $region25: #{prenorm_linear.1} parent=11 // pred_check
        %p199 = pneg %p143
      $region26: #{prenorm_linear.1} parent=11 // pred_check_branch
        %201 = sbr.rel (%p199) target = $region28
      $region27: #{prenorm_linear.1} parent=11 // pred_region
        %p202 = scmp.lt.s32.totalorder %s21, 0
        %s203 = scalar_select %p202, %s21, 0
        %s204 = scalar_lea.vmem %s4, %s203
      $region28: #{prenorm_linear.1} parent=11 // pred_fallthru
        _
    $region12: #{prenorm_linear.1} parent=5 // pred_fallthru
      _
    %p205 = scmp.lt.s32.totalorder %s11, 2
    // Predicated region
    $region29: #{prenorm_linear.1} parent=5 // pred_check
      %p206 = pneg %p205
    $region30: #{prenorm_linear.1} parent=5 // pred_check_branch
      %208 = sbr.rel (%p206) target = $region32
    $region31: #{prenorm_linear.1} parent=5 // pred_region
      // Predicated region
      $region33: #{prenorm_linear.1} parent=31 // pred_check
        %p209 = pneg %p43
      $region34: #{prenorm_linear.1} parent=31 // pred_check_branch
        %211 = sbr.rel (%p209) target = $region36
      $region35: #{prenorm_linear.1} parent=31 // pred_region
        %p212 = scmp.lt.s32.totalorder %s18, 1
        %s213 = scalar_select %p212, %s18, 1
        %s214 = smul.addr %s213, 8
        %s215 = scalar_lea.vmem %s0, %s214
      $region36: #{prenorm_linear.1} parent=31 // pred_fallthru
        _
    $region32: #{prenorm_linear.1} parent=5 // pred_fallthru
      _
    %p216 = scmp.le.s32.totalorder 1, %s11
    %p217 = scmp.lt.s32.totalorder %s11, 3
    %p218 = pnand %p216, %p217
    %p219 = pneg %p218
    // Predicated region
    $region37: #{prenorm_linear.1} parent=5 // pred_check
      _
    $region38: #{prenorm_linear.1} parent=5 // pred_check_branch
      %221 = sbr.rel (%p218) target = $region40
    $region39: #{prenorm_linear.1} parent=5 // pred_region
      %s222 = ssub.s32 %s11, 1
      %p223 = scmp.lt.s32.totalorder %s20, 1
      %s224 = scalar_select %p223, %s20, 1
      %s225 = smul.addr %s224, 8
      %s226 = scalar_lea.vmem %s0, %s225
      %p227 = pneg %p49
      %p228 = pneg %p46
      %p229 = pneg %p70
      %p230 = pneg %p67
      %p231 = pneg %p91
      %p232 = pneg %p88
      %p233 = scmp.lt.s32.totalorder %s21, 0
      %s234 = scalar_select %p233, %s21, 0
      %s235 = smul.addr %s234, 8
      %s236 = scalar_lea.vmem %s3, %s235
      %p237 = pneg %p117
      %p238 = pneg %p114
      %p239 = scmp.lt.s32.totalorder %s21, 0
      %s240 = scalar_select %p239, %s21, 0
      %s241 = scalar_lea.vmem %s4, %s240
      %p242 = pneg %p143
      %p243 = pneg %p140
      %p244 = pneg %p171
      %p245 = pneg %p168
      %p246 = scmp.lt.s32.totalorder %s20, 1
      %s247 = scalar_select %p246, %s20, 1
      %p248 = scmp.lt.s32.totalorder %s21, 0
      %s249 = scalar_select %p248, %s21, 0
      %s250 = sadd.s32 %s249, %s247
      %s251 = smul.addr %s250, 8
      %s252 = scalar_lea.vmem %s5, %s251
      %p253 = scmp.lt.s32.totalorder %s20, 1
      %s254 = scalar_select %p253, %s20, 1
      %s255 = smul.addr %s254, 8
      %s256 = scalar_lea.vmem %s0, %s255
      %p257 = scmp.lt.s32.totalorder %s21, 0
      %s258 = scalar_select %p257, %s21, 0
      %s259 = smul.addr %s258, 8
      %s260 = scalar_lea.vmem %s3, %s259
      %p261 = scmp.lt.s32.totalorder %s21, 0
      %s262 = scalar_select %p261, %s21, 0
      %s263 = scalar_lea.vmem %s4, %s262
      %p264 = scmp.lt.s32.totalorder %s20, 1
      %s265 = scalar_select %p264, %s20, 1
      %p266 = scmp.lt.s32.totalorder %s21, 0
      %s267 = scalar_select %p266, %s21, 0
      %s268 = sadd.s32 %s267, %s265
      %s269 = smul.addr %s268, 8
      %s270 = scalar_lea.vmem %s5, %s269
      %p271 = scmp.eq.s32.totalorder %s21, 0
      // Predicated region
      $region41: #{prenorm_linear.1} parent=39 // pred_check
        %p272 = pneg %p271
      $region42: #{prenorm_linear.1} parent=39 // pred_check_branch
        %274 = sbr.rel (%p272) target = $region44
      $region43: #{prenorm_linear.1} parent=39 // pred_region
        %v275 = vld [vmem:[%s256] sm:$0xff]
        %v276 = vld [vmem:[%s1] sm:$0x1]
        %v277 = vld [vmem:[%s2] sm:$0x1]
        %278 = vadd.xlane.f32.xlu0 %v275
        %v279 = vpop.xlane.xlu0 %278
        %v280 = vmul.f32 %v279, 0.03125
        %v281 = vsub.f32 %v275, %v280
        %v282 = vlaneseq
        %v283 = vand.u32 %v282, 127
        %vm284 = vcmp.lt.s32.totalorder %v283, 32
        %v285 = vsel %vm284, 1, 0
        %vm286 = vcmp.eq.s32.totalorder %v285, 1
        %v287 = vsel %vm286, %v281, 0.0
        %v288 = vmul.f32 %v287, %v287
        %289 = vadd.xlane.f32.xlu0 %v288
        %v290 = vpop.xlane.xlu0 %289
        %v291 = vmul.f32 %v290, 0.03125
        %v292 = vadd.f32 %v291, 1e-05
        %v293 = vrsqrt.pop %v292
        %v294 = vmul.f32 %v293, %v292
        %v295 = vmul.f32 %v294, %v293
        %v296 = vmul.f32 0.5, %v295
        %v297 = vsub.f32 1.5, %v296
        %v298 = vmul.f32 %v293, %v297
        %vm299 = vweird.f32 %v292
        %vm300 = vweird.f32 %v293
        %vm301 = vmor %vm299, %vm300
        %v302 = vsel %vm301, %v293, %v298
        %v304 = vperm.slane %v276, 0
        %v306 = vmul.f32 %v302, %v304
        %v307 = vmul.f32 %v287, %v306
        %v309 = vperm.slane %v277, 0
        %v311 = vadd.f32 %v307, %v309
        %312 = vst [vmem:[#allocation2] sm:$0xff] %v311
      $region44: #{prenorm_linear.1} parent=39 // pred_fallthru
        _
      %v313 = vld [vmem:[#allocation2] sm:$0xff]
      %v314 = vld [vmem:[%s260] sm:$0xff]
      %v315 = vld [vmem:[%s260 + $0x8] sm:$0xff]
      %v316 = vld [vmem:[%s260 + $0x10] sm:$0xff]
      %v317 = vld [vmem:[%s260 + $0x18] sm:$0xff]
      %v318 = vld [vmem:[%s260 + $0x20] sm:$0xff]
      %v319 = vld [vmem:[%s260 + $0x28] sm:$0xff]
      %v320 = vld [vmem:[%s260 + $0x30] sm:$0xff]
      %v321 = vld [vmem:[%s260 + $0x38] sm:$0xff]
      %v322 = vld [vmem:[%s260 + $0x40] sm:$0xff]
      %v323 = vld [vmem:[%s260 + $0x48] sm:$0xff]
      %v324 = vld [vmem:[%s260 + $0x50] sm:$0xff]
      %v325 = vld [vmem:[%s260 + $0x58] sm:$0xff]
      %v326 = vld [vmem:[%s260 + $0x60] sm:$0xff]
      %v327 = vld [vmem:[%s260 + $0x68] sm:$0xff]
      %v328 = vld [vmem:[%s260 + $0x70] sm:$0xff]
      %v329 = vld [vmem:[%s260 + $0x78] sm:$0xff]
      %v330 = vld [vmem:[%s263] sm:$0x1]
      %v332 = vperm.slane %v330, 0
      %334 = vmatpush.msra.mxu0 %v329
      %335 = vmatpush.msra.mxu0 %v328
      %336 = vmatpush.msra.mxu0 %v327
      %337 = vmatpush.msra.mxu0 %v326
      %338 = vmatpush.msra.mxu0 %v325
      %339 = vmatpush.msra.mxu0 %v324
      %340 = vmatpush.msra.mxu0 %v323
      %341 = vmatpush.msra.mxu0 %v322
      %342 = vmatpush.msra.mxu0 %v321
      %343 = vmatpush.msra.mxu0 %v320
      %344 = vmatpush.msra.mxu0 %v319
      %345 = vmatpush.msra.mxu0 %v318
      %346 = vmatpush.msra.mxu0 %v317
      %347 = vmatpush.msra.mxu0 %v316
      %348 = vmatpush.msra.mxu0 %v315
      %349 = vmatpush.msra.mxu0 %v314
      %350 = vmatmul.f32.gmra.mxu0 %v313
      %v351 = vpop.f32.mrf.mxu0
      %v352 = vadd.f32 %v332, %v351
      %353 = vdwg.mxu0
      %354 = vst [vmem:[%s270] sm:$0xff] %v352
      %p355 = scmp.lt.s32.totalorder %s20, 1
      %s356 = scalar_select %p355, %s20, 1
      %p357 = scmp.lt.s32.totalorder %s21, 0
      %s358 = scalar_select %p357, %s21, 0
      %s359 = sadd.s32 %s358, %s356
      %s360 = smul.addr %s359, 8
      %s361 = scalar_lea.vmem %s5, %s360
      // Predicated region
      $region45: #{prenorm_linear.1} parent=39 // pred_check
        %p362 = pneg %p168
      $region46: #{prenorm_linear.1} parent=39 // pred_check_branch
        %364 = sbr.rel (%p362) target = $region48
      $region47: #{prenorm_linear.1} parent=39 // pred_region
        _
      $region48: #{prenorm_linear.1} parent=39 // pred_fallthru
        _
    $region40: #{prenorm_linear.1} parent=5 // pred_fallthru
      _
    %p365 = scmp.le.s32.totalorder 2, %s11
    // Predicated region
    $region49: #{prenorm_linear.1} parent=5 // pred_check
      %p366 = pneg %p365
    $region50: #{prenorm_linear.1} parent=5 // pred_check_branch
      %368 = sbr.rel (%p366) target = $region52
    $region51: #{prenorm_linear.1} parent=5 // pred_region
      %s369 = ssub.s32 %s11, 2
      // Predicated region
      $region53: #{prenorm_linear.1} parent=51 // pred_check
        %p370 = pneg %p174
      $region54: #{prenorm_linear.1} parent=51 // pred_check_branch
        %372 = sbr.rel (%p370) target = $region56
      $region55: #{prenorm_linear.1} parent=51 // pred_region
        %p373 = scmp.lt.s32.totalorder %s22, 1
        %s374 = scalar_select %p373, %s22, 1
        %p375 = scmp.lt.s32.totalorder %s23, 0
        %s376 = scalar_select %p375, %s23, 0
        %s377 = sadd.s32 %s376, %s374
        %s378 = smul.addr %s377, 8
        %s379 = scalar_lea.vmem %s5, %s378
      $region56: #{prenorm_linear.1} parent=51 // pred_fallthru
        _
    $region52: #{prenorm_linear.1} parent=5 // pred_fallthru
      _
  $region6: #{prenorm_linear.1} parent=0 // loop_footer
    %s15 = sadd.s32 1, %s11
  $region7: #{prenorm_linear.1} parent=0 // loop_footer_branch
    %10 = sbr.rel target = $region3
  $region8: #{prenorm_linear.1} parent=0 // loop_exit
    _

</llo_original>
